<compile_context>
chip_gen: v7x
topology: tpu7x:2x2x1
jax: 0.10.0
libtpu: 0.0.40
codegen_flags: <defaults>
</compile_context>

<pallas_src>
import jax
import jax.numpy as jnp
from jax.experimental import pallas as pl
from jax.experimental.pallas import tpu as pltpu

LANE = 128                  # lane width (last dim of a vreg)
SUB = 8                     # sublane count (second-to-last dim of a vreg)
CHUNK = 512                 # rows per in-kernel reduction sub-chunk
MAX_FULL_BLOCK_ROWS = 4096  # cap for the "block == full M" ragged fallback


def _cdiv(a, b):
    return -(-a // b)


def _tuning():
    """Generation-aware block size / core count / scoped-VMEM settings."""
    try:
        kind = jax.devices()[0].device_kind.lower()
    except Exception:  # pragma: no cover - defensive
        kind = ""
    if "v7" in kind:
        return {"bm_max": 8192, "ncores": 2, "vmem_limit": 48 * 1024 * 1024}
    if "v6" in kind:
        return {"bm_max": 8192, "ncores": 1, "vmem_limit": 48 * 1024 * 1024}
    if "v5e" in kind or "lite" in kind:            # v5e: 16 MiB scoped default
        return {"bm_max": 4096, "ncores": 1, "vmem_limit": None}
    if "v5p" in kind or "v5" in kind:
        return {"bm_max": 8192, "ncores": 2, "vmem_limit": 48 * 1024 * 1024}
    if "v4" in kind:
        return {"bm_max": 4096, "ncores": 2, "vmem_limit": None}
    return {"bm_max": 4096, "ncores": 1, "vmem_limit": None}


def _pick_unroll(nc):
    if nc <= 8:
        return nc
    for u in (8, 4, 2):
        if nc % u == 0:
            return u
    return 1


def _make_sse_kernel(M, BM, C, T, needs_mask, ragged):
    """SSE kernel closed over static sizes.

    M          : valid 128-wide rows per G-slice
    BM         : rows per block (multiple of 8, or == M on the ragged path)
    C          : rows per in-kernel reduction chunk (divides BM)
    T          : blocks along M per G-slice
    needs_mask : last block extends past M (stale buffer rows masked)
    ragged     : BM == M with M % 8 != 0 -> column-sum into sublane 0
    """
    nc_full = BM // C
    tail_rows = M - (T - 1) * BM
    nc_tail = _cdiv(tail_rows, C)
    tail_base = (T - 1) * BM

    def kernel(a_ref, b_ref, out_ref):
        t = pl.program_id(1)

        @pl.when(t == 0)
        def _():
            out_ref[...] = jnp.zeros_like(out_ref)

        if ragged:
            # Single block covering all M rows, M not a multiple of 8: reduce
            # rows fully and deposit the column sums into sublane 0.
            a = a_ref[0].astype(jnp.float32)
            b = b_ref[0].astype(jnp.float32)
            d = a - b
            colsum = (d * d).sum(axis=0, keepdims=True)             # (1, LANE)
            sub_id = jax.lax.broadcasted_iota(jnp.int32, (SUB, LANE), 0)
            out_ref[...] += jnp.where(sub_id == 0, colsum, 0.0).reshape(
                1, SUB, LANE)
            return

        def block_sse(masked, nc):
            def chunk(i, acc):
                if isinstance(i, int):
                    off = i * C
                else:
                    off = pl.multiple_of(i * C, C)
                a = a_ref[0, pl.ds(off, C), :].astype(jnp.float32)
                b = b_ref[0, pl.ds(off, C), :].astype(jnp.float32)
                d = a - b
                if masked:
                    row = tail_base + off + jax.lax.broadcasted_iota(
                        jnp.int32, (C, LANE), 0)
                    d = jnp.where(row < M, d, 0.0)
                dsq = d * d
                return acc + dsq.reshape(C // SUB, SUB, LANE).sum(axis=0)

            init = jnp.zeros((SUB, LANE), jnp.float32)
            if nc == 1:
                return chunk(0, init)
            return jax.lax.fori_loop(0, nc, chunk, init,
                                     unroll=_pick_unroll(nc))

        if not needs_mask:
            out_ref[...] += block_sse(False, nc_full).reshape(1, SUB, LANE)
        else:
            # Only the tail block pays for the row mask; full blocks stay a
            # pure sub/mul/accumulate stream.
            @pl.when(t < T - 1)
            def _():
                out_ref[...] += block_sse(False, nc_full).reshape(1, SUB, LANE)

            @pl.when(t == T - 1)
            def _():
                out_ref[...] += block_sse(True, nc_tail).reshape(1, SUB, LANE)

    return kernel


def _batched_sse(a3, b3, tune):
    """a3, b3: (G, M, LANE). Returns (G, 8, 128) partial sums; summing a
    slice's (8, 128) tile gives sum((a3[g] - b3[g])**2)."""
    G, M, L = a3.shape
    assert L == LANE and M >= 1
    bm_max = tune["bm_max"]

    if M % SUB == 0:
        if M >= CHUNK:
            BM = min(bm_max, (M // CHUNK) * CHUNK)   # multiple of CHUNK, <= M
            C = CHUNK
        else:
            BM = M                                    # small, multiple of 8
            C = BM
        ragged = False
    else:
        assert M <= MAX_FULL_BLOCK_ROWS
        BM = M                                        # block == full dim
        C = BM
        ragged = True

    T = _cdiv(M, BM)
    needs_mask = (T * BM != M)

    kernel = _make_sse_kernel(M, BM, C, T, needs_mask, ragged)

    itemsize = jnp.dtype(a3.dtype).itemsize
    cost = pl.CostEstimate(
        flops=3 * G * M * LANE,
        transcendentals=0,
        bytes_accessed=2 * G * M * LANE * itemsize + G * SUB * LANE * 4,
    )

    cparams = {"dimension_semantics": ("parallel", "arbitrary")}
    if tune.get("vmem_limit"):
        cparams["vmem_limit_bytes"] = tune["vmem_limit"]

    return pl.pallas_call(
        kernel,
        out_shape=jax.ShapeDtypeStruct((G, SUB, LANE), jnp.float32),
        grid_spec=pltpu.PrefetchScalarGridSpec(
            num_scalar_prefetch=0,
            grid=(G, T),
            in_specs=[
                pl.BlockSpec((1, BM, LANE), lambda g, t: (g, t, 0)),
                pl.BlockSpec((1, BM, LANE), lambda g, t: (g, t, 0)),
            ],
            out_specs=pl.BlockSpec((1, SUB, LANE), lambda g, t: (g, 0, 0)),
        ),
        compiler_params=pltpu.CompilerParams(**cparams),
        cost_estimate=cost,
    )(a3, b3)


def psnr(inputs, targets, valid_mask=None, regnerf_mask=None, reduction="mean"):
    """Pallas-backed PSNR matching the PyTorch module semantics.

    reduction='mean' -> scalar f32
    reduction='none' -> (B,) f32 (mean over all axes except the first)
    """
    assert reduction in ("mean", "none")
    if valid_mask is not None or regnerf_mask is not None:
        # TODO(synk): boolean-mask indexing yields data-dependent shapes; no
        # clean static-shape Pallas equivalent, so the masked paths are omitted.
        raise NotImplementedError("masked PSNR paths not implemented")

    inputs = jnp.asarray(inputs)
    targets = jnp.asarray(targets)

    if reduction == "mean":
        flat_a = inputs.reshape(1, -1)
        flat_b = targets.reshape(1, -1)
    else:
        B = inputs.shape[0]
        flat_a = inputs.reshape(B, -1)
        flat_b = targets.reshape(B, -1)

    G, N = flat_a.shape
    count = jnp.float32(N)

    tail_sse = jnp.zeros((G,), jnp.float32)
    r = N % LANE
    if r:
        if N < LANE:
            # Degenerate tiny input: pad to a single lane row (zeros add 0).
            flat_a = jnp.pad(flat_a, ((0, 0), (0, LANE - N)))
            flat_b = jnp.pad(flat_b, ((0, 0), (0, LANE - N)))
            main = LANE
        else:
            # Ragged <128-element tail handled in plain JAX; kernel runs on
            # the lane-aligned prefix (no full-tensor pad copy).
            main = N - r
            ta = flat_a[:, main:].astype(jnp.float32)
            tb = flat_b[:, main:].astype(jnp.float32)
            tail_sse = jnp.sum((ta - tb) ** 2, axis=1)
            flat_a = flat_a[:, :main]
            flat_b = flat_b[:, :main]
    else:
        main = N

    M = main // LANE

    # Rare: huge slice whose row count is not a multiple of 8 -> pad to full
    # (8*128) alignment so bounded blocks can be used.
    if M % SUB != 0 and M > MAX_FULL_BLOCK_ROWS:
        padr = (-main) % (SUB * LANE)
        flat_a = jnp.pad(flat_a, ((0, 0), (0, padr)))
        flat_b = jnp.pad(flat_b, ((0, 0), (0, padr)))
        main += padr
        M = main // LANE

    tune = _tuning()

    # Multi-TensorCore chips: split the single 'mean' slice in two (free
    # reshape) so the "parallel" G axis feeds both cores.
    G_k, M_k = G, M
    if (reduction == "mean" and G == 1 and tune["ncores"] >= 2
            and M % (2 * SUB) == 0 and M >= 2 * CHUNK):
        G_k, M_k = 2, M // 2

    a3 = flat_a.reshape(G_k, M_k, LANE)
    b3 = flat_b.reshape(G_k, M_k, LANE)

    partial = _batched_sse(a3, b3, tune)          # (G_k, 8, 128)

    if reduction == "mean":
        sse = jnp.sum(partial) + jnp.sum(tail_sse)
        mse = sse / count                         # padded zeros contribute 0
        return -10.0 * jnp.log10(mse)             # mse==0 -> +inf, like torch

    sse = jnp.sum(partial, axis=(1, 2)) + tail_sse
    mse = sse / count
    return -10.0 * jnp.log10(mse)


def _psnr_ref(inputs, targets, reduction="mean"):
    value = (inputs - targets) ** 2
    if reduction == "mean":
        return -10.0 * jnp.log10(jnp.mean(value))
    axes = tuple(range(1, value.ndim))
    return -10.0 * jnp.log10(jnp.mean(value, axis=axes))


if __name__ == "__main__":
    key = jax.random.PRNGKey(0)
    k1, k2, k3, k4, k5, k6 = jax.random.split(key, 6)

    # Primary small NCHW test: batch=2, channels=4, spatial=16.
    x = jax.random.uniform(k1, (2, 4, 16, 16), dtype=jnp.float32)
    y = jax.random.uniform(k2, (2, 4, 16, 16), dtype=jnp.float32)

    out_mean = jax.block_until_ready(psnr(x, y, reduction="mean"))
    out_none = jax.block_until_ready(psnr(x, y, reduction="none"))
    assert out_mean.shape == ()
    assert out_none.shape == (2,)
    assert jnp.allclose(out_mean, _psnr_ref(x, y, "mean"), rtol=1e-5, atol=1e-5)
    assert jnp.allclose(out_none, _psnr_ref(x, y, "none"), rtol=1e-5, atol=1e-5)

    # Multi-block path with a partial (masked) tail block
    # (N = 307200 -> 2400 rows -> blocks of 2048 + masked 352-row tail).
    x2 = jax.random.uniform(k3, (1, 3, 320, 320), dtype=jnp.float32)
    y2 = jax.random.uniform(k4, (1, 3, 320, 320), dtype=jnp.float32)
    out2 = jax.block_until_ready(psnr(x2, y2, reduction="mean"))
    assert jnp.allclose(out2, _psnr_ref(x2, y2, "mean"), rtol=1e-5, atol=1e-5)

    # Lane-ragged path (N % 128 != 0): JAX tail + ragged single-block kernel.
    x3 = jax.random.uniform(k5, (2, 3, 10, 10), dtype=jnp.float32)
    y3 = jax.random.uniform(k6, (2, 3, 10, 10), dtype=jnp.float32)
    out3m = jax.block_until_ready(psnr(x3, y3, reduction="mean"))
    out3n = jax.block_until_ready(psnr(x3, y3, reduction="none"))
    assert jnp.allclose(out3m, _psnr_ref(x3, y3, "mean"), rtol=1e-5, atol=1e-5)
    assert jnp.allclose(out3n, _psnr_ref(x3, y3, "none"), rtol=1e-5, atol=1e-5)

    print("KERNEL_OK")
</pallas_src>

<mosaic_0001>
module attributes {stable_mosaic.version = 11 : i64} {
  func.func @kernel(%arg0: i32, %arg1: i32, %arg2: memref<1x16x128xf32, #tpu.memory_space<vmem>>, %arg3: memref<1x16x128xf32, #tpu.memory_space<vmem>>, %arg4: memref<1x8x128xf32, #tpu.memory_space<vmem>>) attributes {dimension_semantics = [#tpu.dimension_semantics<parallel>, #tpu.dimension_semantics<arbitrary>], iteration_bounds = array<i64: 1, 1>, scalar_prefetch = 0 : i64, scratch_operands = 0 : i64, tpu.core_type = #tpu.core_type<tc>, window_params = [{transform_indices = @transform_0, window_bounds = array<i64: 1, 16, 128>}, {transform_indices = @transform_1, window_bounds = array<i64: 1, 16, 128>}, {transform_indices = @transform_2, window_bounds = array<i64: 1, 8, 128>}]} {
    %c0_i32 = arith.constant 0 : i32
    %0 = arith.cmpi eq, %arg1, %c0_i32 : i32
    %1 = arith.extui %0 : i1 to i32
    %c0_i32_0 = arith.constant 0 : i32
    %2 = arith.cmpi ne, %1, %c0_i32_0 : i32
    scf.if %2 {
      %cst_13 = arith.constant 0.000000e+00 : f32
      %17 = vector.broadcast %cst_13 : f32 to vector<1x8x128xf32>
      %c0_14 = arith.constant 0 : index
      %c0_15 = arith.constant 0 : index
      %c0_16 = arith.constant 0 : index
      %18 = vector.load %arg4[%c0_14, %c0_15, %c0_16] : memref<1x8x128xf32, #tpu.memory_space<vmem>>, vector<1x8x128xf32>
      tpu.vector_store %arg4[%c0_14, %c0_15, %c0_16], %17 {strides = array<i32>} : memref<1x8x128xf32, #tpu.memory_space<vmem>>, vector<1x8x128xf32>,
    } else {
    }
    %c0 = arith.constant 0 : index
    %c0_1 = arith.constant 0 : index
    %c0_2 = arith.constant 0 : index
    %3 = vector.load %arg4[%c0, %c0_1, %c0_2] : memref<1x8x128xf32, #tpu.memory_space<vmem>>, vector<1x8x128xf32>
    %cst = arith.constant 0.000000e+00 : f32
    %4 = vector.broadcast %cst : f32 to vector<8x128xf32>
    %c0_3 = arith.constant 0 : index
    %c0_4 = arith.constant 0 : index
    %c0_5 = arith.constant 0 : index
    %5 = vector.load %arg2[%c0_3, %c0_4, %c0_5] : memref<1x16x128xf32, #tpu.memory_space<vmem>>, vector<1x16x128xf32>
    %6 = vector.shape_cast %5 : vector<1x16x128xf32> to vector<16x128xf32>
    %c0_6 = arith.constant 0 : index
    %c0_7 = arith.constant 0 : index
    %c0_8 = arith.constant 0 : index
    %7 = vector.load %arg3[%c0_6, %c0_7, %c0_8] : memref<1x16x128xf32, #tpu.memory_space<vmem>>, vector<1x16x128xf32>
    %8 = vector.shape_cast %7 : vector<1x16x128xf32> to vector<16x128xf32>
    %9 = arith.subf %6, %8 : vector<16x128xf32>
    %10 = arith.mulf %9, %9 : vector<16x128xf32>
    %11 = vector.shape_cast %10 : vector<16x128xf32> to vector<2x8x128xf32>
    %cst_9 = arith.constant dense<0.000000e+00> : vector<8x128xf32>
    %12 = vector.multi_reduction <add>, %11, %cst_9 [0] : vector<2x8x128xf32> to vector<8x128xf32>
    %13 = arith.addf %4, %12 : vector<8x128xf32>
    %14 = vector.shape_cast %13 : vector<8x128xf32> to vector<1x8x128xf32>
    %15 = arith.addf %3, %14 : vector<1x8x128xf32>
    %c0_10 = arith.constant 0 : index
    %c0_11 = arith.constant 0 : index
    %c0_12 = arith.constant 0 : index
    %16 = vector.load %arg4[%c0_10, %c0_11, %c0_12] : memref<1x8x128xf32, #tpu.memory_space<vmem>>, vector<1x8x128xf32>
    tpu.vector_store %arg4[%c0_10, %c0_11, %c0_12], %15 {strides = array<i32>} : memref<1x8x128xf32, #tpu.memory_space<vmem>>, vector<1x8x128xf32>,
    return
  }
  func.func @transform_0(%arg0: i32, %arg1: i32) -> (i32, i32, i32) {
    %c0_i32 = arith.constant 0 : i32
    %c0_i32_0 = arith.constant 0 : i32
    return %arg0, %arg1, %c0_i32 : i32, i32, i32
  }
  func.func @transform_1(%arg0: i32, %arg1: i32) -> (i32, i32, i32) {
    %c0_i32 = arith.constant 0 : i32
    %c0_i32_0 = arith.constant 0 : i32
    return %arg0, %arg1, %c0_i32 : i32, i32, i32
  }
  func.func @transform_2(%arg0: i32, %arg1: i32) -> (i32, i32, i32) {
    %c0_i32 = arith.constant 0 : i32
    %c0_i32_0 = arith.constant 0 : i32
    %c0_i32_1 = arith.constant 0 : i32
    return %arg0, %c0_i32, %c0_i32_0 : i32, i32, i32
  }
}

</mosaic_0001>

<llo_original>
// kernel: tpu_custom_call.1
$region0: #{tpu_custom_call.1}
  #allocation0 [shape = 'u32[]', space=smem, size = 0x4, offset = 0x4, fixed_abs, tag = 'smem constant byte address 0x4 - core index']
  #allocation1 [shape = 'u32[144,128]{1,0:T(1,128)}', space=vmem, size = 0x12000, scoped, tag = 'internal scratch']
  %s0 = inlined_call_operand.hbm [shape: f32[1,16,128], index: 0, kind: input, shape index: {}]
  %s1 = inlined_call_operand.hbm [shape: f32[1,16,128], index: 1, kind: input, shape index: {}]
  %s2 = inlined_call_operand.hbm [shape: f32[1,8,128], index: 2, kind: output, shape index: {}]
  %s3 = sld [smem:[#allocation0]]
  $region30: #{tpu_custom_call.1} parent=0
    _
  %s5 = ssub.s32 1, %s3
  %s6 = scalar_select 0, %s5, %s3
  $region1: #{tpu_custom_call.1} parent=0
    #allocation2 [shape = 'u8[8192]{0}', space=vmem, size = 0x2000, scoped, tag = 'input window, operand 0, single buffered']
    #allocation3 [shape = 's32[1]{0}', space=sflag, size = 0x4, scoped, tag = 'scoped memory for tpu_custom_call.1']
    #allocation4 [shape = 's32[1]{0}', space=sflag, size = 0x4, scoped, tag = 'scoped memory for tpu_custom_call.1']
    #allocation5 [shape = 'u8[8192]{0}', space=vmem, size = 0x2000, scoped, tag = 'input window, operand 1, single buffered']
    #allocation6 [shape = 's32[1]{0}', space=sflag, size = 0x4, scoped, tag = 'scoped memory for tpu_custom_call.1']
    #allocation7 [shape = 'u8[4096]{0}', space=vmem, size = 0x1000, scoped, tag = 'output window, operand 0, single buffered']
    %7 = vsyncpa [#allocation3], 0
    %8 = vsyncpa [#allocation6], 0
    %9 = vsyncpa [#allocation4], 0
    // Predicated region
    $region2: #{tpu_custom_call.1} parent=1 // pred_check
      _
    $region3: #{tpu_custom_call.1} parent=1 // pred_check_branch
      %11 = sbr.rel (0) target = $region5
    $region4: #{tpu_custom_call.1} parent=1 // pred_region
      %s13 = ssub.s32 256, 256
      %14 = vsyncadd [#allocation3], %s13
      %s15 = sshll.u32 [#allocation2], 4
      %s16 = int_to_ptr.vmem [resolvable:$true] %s15
      %21 = dma.hbm_to_vmem [thread:$0]  %s0, 256, %s16, [#allocation3], 128, 128, 8
    $region5: #{tpu_custom_call.1} parent=1 // pred_fallthru
      _
    // Predicated region
    $region6: #{tpu_custom_call.1} parent=1 // pred_check
      _
    $region7: #{tpu_custom_call.1} parent=1 // pred_check_branch
      %23 = sbr.rel (0) target = $region9
    $region8: #{tpu_custom_call.1} parent=1 // pred_region
      %s25 = ssub.s32 256, 256
      %26 = vsyncadd [#allocation6], %s25
      %s27 = sshll.u32 [#allocation5], 4
      %s28 = int_to_ptr.vmem [resolvable:$true] %s27
      %33 = dma.hbm_to_vmem [thread:$0]  %s1, 256, %s28, [#allocation6], 128, 128, 8
    $region9: #{tpu_custom_call.1} parent=1 // pred_fallthru
      _
    // Predicated region
    $region10: #{tpu_custom_call.1} parent=1 // pred_check
      _
    $region11: #{tpu_custom_call.1} parent=1 // pred_check_branch
      %35 = sbr.rel (0) target = $region13
    $region12: #{tpu_custom_call.1} parent=1 // pred_region
      %36 = dma.done [#allocation3], 256
    $region13: #{tpu_custom_call.1} parent=1 // pred_fallthru
      _
    // Predicated region
    $region14: #{tpu_custom_call.1} parent=1 // pred_check
      _
    $region15: #{tpu_custom_call.1} parent=1 // pred_check_branch
      %38 = sbr.rel (0) target = $region17
    $region16: #{tpu_custom_call.1} parent=1 // pred_region
      %39 = dma.done [#allocation6], 256
    $region17: #{tpu_custom_call.1} parent=1 // pred_fallthru
      _
    %p40 = scmp.eq.s32.totalorder 0, 0
    // Predicated region
    $region18: #{tpu_custom_call.1} parent=1 // pred_check
      %p41 = pneg %p40
    $region19: #{tpu_custom_call.1} parent=1 // pred_check_branch
      %43 = sbr.rel (%p41) target = $region21
    $region20: #{tpu_custom_call.1} parent=1 // pred_region
      %44 = vst [vmem:[#allocation7] sm:$0xff] 0.0
    $region21: #{tpu_custom_call.1} parent=1 // pred_fallthru
      _
    %v45 = vld [vmem:[#allocation7] sm:$0xff]
    %v46 = vld [vmem:[#allocation2] sm:$0xff]
    %v47 = vld [vmem:[#allocation2 + $0x8] sm:$0xff]
    %v48 = vld [vmem:[#allocation5] sm:$0xff]
    %v49 = vld [vmem:[#allocation5 + $0x8] sm:$0xff]
    %v50 = vsub.f32 %v46, %v48
    %v51 = vsub.f32 %v47, %v49
    %v52 = vmul.f32 %v50, %v50
    %v53 = vmul.f32 %v51, %v51
    %v54 = vadd.f32 %v52, %v53
    %v55 = vadd.f32 %v54, 0.0
    %v56 = vadd.f32 %v45, %v55
    %57 = vst [vmem:[#allocation7] sm:$0xff] %v56
    // Predicated region
    $region22: #{tpu_custom_call.1} parent=1 // pred_check
      _
    $region23: #{tpu_custom_call.1} parent=1 // pred_check_branch
      %59 = sbr.rel (0) target = $region25
    $region24: #{tpu_custom_call.1} parent=1 // pred_region
      %s61 = ssub.s32 128, 128
      %62 = vsyncadd [#allocation4], %s61
      %s64 = sshll.u32 [#allocation7], 4
      %s65 = int_to_ptr.vmem [resolvable:$true] %s64
      %67 = dma.vmem_to_hbm [thread:$0]  %s65, 128, %s2, [#allocation4]
    $region25: #{tpu_custom_call.1} parent=1 // pred_fallthru
      _
    // Predicated region
    $region26: #{tpu_custom_call.1} parent=1 // pred_check
      _
    $region27: #{tpu_custom_call.1} parent=1 // pred_check_branch
      %69 = sbr.rel (0) target = $region29
    $region28: #{tpu_custom_call.1} parent=1 // pred_region
      %70 = dma.done [#allocation4], 128
    $region29: #{tpu_custom_call.1} parent=1 // pred_fallthru
      _
    %71 = vsyncpa [#allocation3], 1
    %72 = vsyncpa [#allocation6], 1
    %73 = vsyncpa [#allocation4], 1

</llo_original>
